<compile_context>
chip_gen: v6e
topology: v6e:2x2x1
jax: 0.10.0
libtpu: 0.0.40
codegen_flags: <defaults>
</compile_context>

<pallas_src>
import jax
import jax.numpy as jnp
from jax.experimental import pallas as pl
from jax.experimental.pallas import tpu as pltpu


def _round_up(x, m):
    return ((x + m - 1) // m) * m


def _qnet_kernel(x_ref, b1_ref, w1_ref, w2_ref, w3_ref, o_ref):
    """One batch tile through the full 3-layer MLP (dropout = identity, eval mode)."""
    cd = w2_ref.dtype  # compute dtype fed to the MXU

    x = x_ref[...]  # (tb, input_size) — narrow, lane-masked load (tiny)

    # Layer 1: f32 accumulate, bias add + ReLU epilogue in f32.
    h = jnp.dot(x, w1_ref[...], preferred_element_type=jnp.float32)
    h = h + b1_ref[...].astype(jnp.float32)   # bias + constant-1 lane at col hidden_size
    h = jnp.maximum(h, 0.0)                    # relu; dropout (eval): identity

    # Layer 2: bias folded into row `hidden_size` of w2a, activated by the 1.0
    # lane; w2a[hidden_size, hidden_size] = 1.0 re-propagates the lane.
    h = jnp.dot(h.astype(cd), w2_ref[...], preferred_element_type=jnp.float32)
    h = jnp.maximum(h, 0.0)                    # relu; dropout (eval): identity

    # Layer 3 (no activation): bias folded into row `hidden_size` of w3a.
    y = jnp.dot(h.astype(cd), w3_ref[...], preferred_element_type=jnp.float32)
    o_ref[...] = y.astype(o_ref.dtype)


def prepare_params(params, input_size, hidden_size, output_size,
                   compute_dtype=jnp.float32):
    """One-time weight prep (hoisted out of the forward path).

    Transposes PyTorch-layout weights to (in, out), zero-pads hidden/output
    lanes to 128, folds the layer-2/3 biases into an extra weight row, and
    bakes the constant-1 "bias lane" propagation into b1a / w2a.
    Padded regions are exactly zero — the ones-lane trick relies on that.
    bf16 is recommended on all TPU generations (f32 accumulation is kept).
    """
    hid_pad = _round_up(hidden_size + 1, 128)  # +1 lane for the bias/ones column
    out_pad = _round_up(output_size, 128)

    w1 = jnp.asarray(params["w1"], jnp.float32)
    w2 = jnp.asarray(params["w2"], jnp.float32)
    w3 = jnp.asarray(params["w3"], jnp.float32)
    b1 = jnp.asarray(params["b1"], jnp.float32)
    b2 = jnp.asarray(params["b2"], jnp.float32)
    b3 = jnp.asarray(params["b3"], jnp.float32)

    # W1: (input_size, hid_pad); padded columns exactly zero.
    w1a = jnp.zeros((input_size, hid_pad), jnp.float32).at[:, :hidden_size].set(w1.T)

    # b1 row; lane `hidden_size` carries the constant 1.0 that activates the
    # folded-bias rows of w2a / w3a downstream.
    b1a = jnp.zeros((1, hid_pad), jnp.float32)
    b1a = b1a.at[0, :hidden_size].set(b1).at[0, hidden_size].set(1.0)

    # W2 augmented: bias in row `hidden_size`, plus 1.0 to re-propagate the lane.
    w2a = jnp.zeros((hid_pad, hid_pad), jnp.float32)
    w2a = w2a.at[:hidden_size, :hidden_size].set(w2.T)
    w2a = w2a.at[hidden_size, :hidden_size].set(b2)
    w2a = w2a.at[hidden_size, hidden_size].set(1.0)

    # W3 augmented: bias in row `hidden_size` (last layer, no propagation needed).
    w3a = jnp.zeros((hid_pad, out_pad), jnp.float32)
    w3a = w3a.at[:hidden_size, :output_size].set(w3.T)
    w3a = w3a.at[hidden_size, :output_size].set(b3)

    return {
        "b1a": b1a.astype(compute_dtype),
        "w1a": w1a.astype(compute_dtype),
        "w2a": w2a.astype(compute_dtype),
        "w3a": w3a.astype(compute_dtype),
        "input_size": input_size,
        "hidden_size": hidden_size,
        "output_size": output_size,
        "hid_pad": hid_pad,
        "out_pad": out_pad,
        "compute_dtype": jnp.dtype(compute_dtype),
    }


def _choose_tb(batch, tb=None):
    """Batch-tile selection (rows per grid step)."""
    b8 = _round_up(batch, 8)
    if tb is not None:
        return max(8, min(_round_up(tb, 8), b8))
    if b8 <= 16:
        return b8                          # tiny batch: single grid step (latency path)
    if b8 <= 2048:
        # Two grid steps so the "parallel" batch axis can shard across both
        # v7x TensorCores (no-op on v5e/v6e).
        return _round_up((b8 + 1) // 2, 8)
    return 1024                            # large batches: big tiles, still only a few MiB of VMEM


def linear_qnet_forward(x, prep, *, tb=None):
    """Batched inference: x is (batch, input_size); returns (batch, output_size)."""
    batch, in_size = x.shape
    assert in_size == prep["input_size"]
    out_size = prep["output_size"]
    hid_pad, out_pad = prep["hid_pad"], prep["out_pad"]
    cd = prep["compute_dtype"]

    tb_ = _choose_tb(batch, tb)
    b_pad = _round_up(batch, tb_)
    grid = (b_pad // tb_,)

    # x stays at its natural lane width; only the batch axis is padded to a
    # tile multiple. Cast to compute dtype (no-op on the f32 path).
    x_in = x.astype(cd)
    if b_pad != batch:
        x_in = jnp.pad(x_in, ((0, b_pad - batch), (0, 0)))

    itemsize = cd.itemsize
    cost = pl.CostEstimate(
        flops=2 * b_pad * (in_size * hid_pad + hid_pad * hid_pad + hid_pad * out_pad),
        transcendentals=0,
        bytes_accessed=(b_pad * in_size + hid_pad                # x + b1 row
                        + in_size * hid_pad + hid_pad * hid_pad  # w1 + w2
                        + hid_pad * out_pad                      # w3
                        + b_pad * out_pad) * itemsize,           # output
    )

    out_padded = pl.pallas_call(
        _qnet_kernel,
        out_shape=jax.ShapeDtypeStruct((b_pad, out_pad), cd),
        grid_spec=pltpu.PrefetchScalarGridSpec(
            num_scalar_prefetch=0,
            grid=grid,
            in_specs=[
                pl.BlockSpec((tb_, in_size), lambda i: (i, 0)),       # x tile (narrow)
                pl.BlockSpec((1, hid_pad), lambda i: (0, 0)),         # b1 + ones lane (resident)
                pl.BlockSpec((in_size, hid_pad), lambda i: (0, 0)),   # W1 (resident)
                pl.BlockSpec((hid_pad, hid_pad), lambda i: (0, 0)),   # W2 aug (resident)
                pl.BlockSpec((hid_pad, out_pad), lambda i: (0, 0)),   # W3 aug (resident)
            ],
            out_specs=pl.BlockSpec((tb_, out_pad), lambda i: (i, 0)),
        ),
        compiler_params=pltpu.CompilerParams(
            dimension_semantics=("parallel",),
        ),
        cost_estimate=cost,
    )(x_in, prep["b1a"], prep["w1a"], prep["w2a"], prep["w3a"])

    return out_padded[:batch, :out_size]


def init_params(key, input_size, hidden_size, output_size):
    """Deterministic init mimicking nn.Linear's U(-1/sqrt(fan_in), 1/sqrt(fan_in))."""
    ks = jax.random.split(key, 6)

    def lin(kw, kb, fan_in, fan_out):
        bound = 1.0 / jnp.sqrt(jnp.float32(fan_in))
        w = jax.random.uniform(kw, (fan_out, fan_in), jnp.float32, -bound, bound)
        b = jax.random.uniform(kb, (fan_out,), jnp.float32, -bound, bound)
        return w, b

    w1, b1 = lin(ks[0], ks[1], input_size, hidden_size)
    w2, b2 = lin(ks[2], ks[3], hidden_size, hidden_size)
    w3, b3 = lin(ks[4], ks[5], hidden_size, output_size)
    return {"w1": w1, "b1": b1, "w2": w2, "b2": b2, "w3": w3, "b3": b3}


def reference_forward(x, p):
    h = jnp.maximum(x @ p["w1"].T + p["b1"], 0.0)
    h = jnp.maximum(h @ p["w2"].T + p["b2"], 0.0)
    return h @ p["w3"].T + p["b3"]


if __name__ == "__main__":
    # Snake-like shapes: 11 game-state features, 32 hidden, 3 actions.
    input_size, hidden_size, output_size = 11, 32, 3

    key = jax.random.PRNGKey(0)
    k_x, k_x2, k_p = jax.random.split(key, 3)
    params = init_params(k_p, input_size, hidden_size, output_size)

    # One-time weight prep (f32 compute path).
    prep_f32 = prepare_params(params, input_size, hidden_size, output_size,
                              compute_dtype=jnp.float32)

    # 1) Tiny batch (single grid step), strict f32 check.
    x = jax.random.normal(k_x, (4, input_size), jnp.float32)
    out = jax.block_until_ready(linear_qnet_forward(x, prep_f32))
    ref = reference_forward(x, params)
    assert out.shape == (4, output_size)
    assert jnp.allclose(out, ref, atol=1e-5, rtol=1e-5), "f32 small-batch mismatch"

    # 2) Larger batch: 2-step batch-tiled grid + batch padding (300 -> 2 x 152).
    x2 = jax.random.normal(k_x2, (300, input_size), jnp.float32)
    out2 = jax.block_until_ready(linear_qnet_forward(x2, prep_f32))
    ref2 = reference_forward(x2, params)
    assert out2.shape == (300, output_size)
    assert jnp.allclose(out2, ref2, atol=1e-5, rtol=1e-5), "f32 tiled-batch mismatch"

    # 3) bf16 compute path (recommended on v5e/v6e/v7x), f32 accumulate/epilogue.
    prep_bf16 = prepare_params(params, input_size, hidden_size, output_size,
                               compute_dtype=jnp.bfloat16)
    out3 = jax.block_until_ready(linear_qnet_forward(x2, prep_bf16))
    assert out3.shape == (300, output_size)
    assert jnp.allclose(out3.astype(jnp.float32), ref2, atol=5e-2, rtol=5e-2), "bf16 mismatch"

    print("KERNEL_OK")
</pallas_src>

<mosaic_0001>
module attributes {stable_mosaic.version = 11 : i64} {
  func.func @_qnet_kernel(%arg0: i32, %arg1: memref<8x11xf32, #tpu.memory_space<vmem>>, %arg2: memref<1x128xf32, #tpu.memory_space<vmem>>, %arg3: memref<11x128xf32, #tpu.memory_space<vmem>>, %arg4: memref<128x128xf32, #tpu.memory_space<vmem>>, %arg5: memref<128x128xf32, #tpu.memory_space<vmem>>, %arg6: memref<8x128xf32, #tpu.memory_space<vmem>>) attributes {dimension_semantics = [#tpu.dimension_semantics<parallel>], iteration_bounds = array<i64: 1>, scalar_prefetch = 0 : i64, scratch_operands = 0 : i64, tpu.core_type = #tpu.core_type<tc>, window_params = [{transform_indices = @transform_0, window_bounds = array<i64: 8, 11>}, {pipeline_mode = #tpu.pipeline_mode<synchronous>, transform_indices = @transform_1, window_bounds = array<i64: 1, 128>}, {pipeline_mode = #tpu.pipeline_mode<synchronous>, transform_indices = @transform_2, window_bounds = array<i64: 11, 128>}, {pipeline_mode = #tpu.pipeline_mode<synchronous>, transform_indices = @transform_3, window_bounds = array<i64: 128, 128>}, {pipeline_mode = #tpu.pipeline_mode<synchronous>, transform_indices = @transform_4, window_bounds = array<i64: 128, 128>}, {transform_indices = @transform_5, window_bounds = array<i64: 8, 128>}]} {
    %c0 = arith.constant 0 : index
    %c0_0 = arith.constant 0 : index
    %0 = vector.load %arg1[%c0, %c0_0] : memref<8x11xf32, #tpu.memory_space<vmem>>, vector<8x11xf32>
    %c0_1 = arith.constant 0 : index
    %c0_2 = arith.constant 0 : index
    %1 = vector.load %arg3[%c0_1, %c0_2] : memref<11x128xf32, #tpu.memory_space<vmem>>, vector<11x128xf32>
    %cst = arith.constant dense<0.000000e+00> : vector<8x128xf32>
    %2 = tpu.matmul %0, %1, %cst {dimension_numbers = #tpu.dot_dimension_numbers<[1], [0], [0], [1], [0, 0, 1, 1], [], []>} : vector<8x11xf32>, vector<11x128xf32>, vector<8x128xf32> -> vector<8x128xf32>
    %c0_3 = arith.constant 0 : index
    %c0_4 = arith.constant 0 : index
    %3 = vector.load %arg2[%c0_3, %c0_4] : memref<1x128xf32, #tpu.memory_space<vmem>>, vector<1x128xf32>
    %4 = vector.broadcast %3 : vector<1x128xf32> to vector<8x128xf32>
    %5 = arith.addf %2, %4 : vector<8x128xf32>
    %cst_5 = arith.constant 0.000000e+00 : f32
    %6 = vector.broadcast %cst_5 : f32 to vector<8x128xf32>
    %7 = arith.maximumf %5, %6 : vector<8x128xf32>
    %c0_6 = arith.constant 0 : index
    %c0_7 = arith.constant 0 : index
    %8 = vector.load %arg4[%c0_6, %c0_7] : memref<128x128xf32, #tpu.memory_space<vmem>>, vector<128x128xf32>
    %cst_8 = arith.constant dense<0.000000e+00> : vector<8x128xf32>
    %9 = tpu.matmul %7, %8, %cst_8 {dimension_numbers = #tpu.dot_dimension_numbers<[1], [0], [0], [1], [0, 0, 1, 1], [], []>} : vector<8x128xf32>, vector<128x128xf32>, vector<8x128xf32> -> vector<8x128xf32>
    %cst_9 = arith.constant 0.000000e+00 : f32
    %10 = vector.broadcast %cst_9 : f32 to vector<8x128xf32>
    %11 = arith.maximumf %9, %10 : vector<8x128xf32>
    %c0_10 = arith.constant 0 : index
    %c0_11 = arith.constant 0 : index
    %12 = vector.load %arg5[%c0_10, %c0_11] : memref<128x128xf32, #tpu.memory_space<vmem>>, vector<128x128xf32>
    %cst_12 = arith.constant dense<0.000000e+00> : vector<8x128xf32>
    %13 = tpu.matmul %11, %12, %cst_12 {dimension_numbers = #tpu.dot_dimension_numbers<[1], [0], [0], [1], [0, 0, 1, 1], [], []>} : vector<8x128xf32>, vector<128x128xf32>, vector<8x128xf32> -> vector<8x128xf32>
    %c0_13 = arith.constant 0 : index
    %c0_14 = arith.constant 0 : index
    %14 = vector.load %arg6[%c0_13, %c0_14] : memref<8x128xf32, #tpu.memory_space<vmem>>, vector<8x128xf32>
    tpu.vector_store %arg6[%c0_13, %c0_14], %13 {strides = array<i32>} : memref<8x128xf32, #tpu.memory_space<vmem>>, vector<8x128xf32>,
    return
  }
  func.func @transform_0(%arg0: i32) -> (i32, i32) {
    %c0_i32 = arith.constant 0 : i32
    %c0_i32_0 = arith.constant 0 : i32
    return %arg0, %c0_i32 : i32, i32
  }
  func.func @transform_1(%arg0: i32) -> (i32, i32) {
    %c0_i32 = arith.constant 0 : i32
    %c0_i32_0 = arith.constant 0 : i32
    %c0_i32_1 = arith.constant 0 : i32
    return %c0_i32, %c0_i32_0 : i32, i32
  }
  func.func @transform_2(%arg0: i32) -> (i32, i32) {
    %c0_i32 = arith.constant 0 : i32
    %c0_i32_0 = arith.constant 0 : i32
    %c0_i32_1 = arith.constant 0 : i32
    return %c0_i32, %c0_i32_0 : i32, i32
  }
  func.func @transform_3(%arg0: i32) -> (i32, i32) {
    %c0_i32 = arith.constant 0 : i32
    %c0_i32_0 = arith.constant 0 : i32
    %c0_i32_1 = arith.constant 0 : i32
    return %c0_i32, %c0_i32_0 : i32, i32
  }
  func.func @transform_4(%arg0: i32) -> (i32, i32) {
    %c0_i32 = arith.constant 0 : i32
    %c0_i32_0 = arith.constant 0 : i32
    %c0_i32_1 = arith.constant 0 : i32
    return %c0_i32, %c0_i32_0 : i32, i32
  }
  func.func @transform_5(%arg0: i32) -> (i32, i32) {
    %c0_i32 = arith.constant 0 : i32
    %c0_i32_0 = arith.constant 0 : i32
    return %arg0, %c0_i32 : i32, i32
  }
}

</mosaic_0001>

<llo_original>
// kernel: tpu_custom_call.1
$region0: #{tpu_custom_call.1}
  #allocation0 [shape = 'u32[]', space=smem, size = 0x4, offset = 0x4, fixed_abs, tag = 'smem constant byte address 0x4 - core index']
  #allocation1 [shape = 'u32[144,128]{1,0:T(1,128)}', space=vmem, size = 0x12000, scoped, tag = 'internal scratch']
  %s0 = inlined_call_operand.hbm [shape: f32[8,11], index: 0, kind: input, shape index: {}]
  %s1 = inlined_call_operand.vmem [shape: f32[1,128], index: 1, kind: input, shape index: {}]
  %s2 = inlined_call_operand.hbm [shape: f32[11,128], index: 2, kind: input, shape index: {}]
  %s3 = inlined_call_operand.hbm [shape: f32[128,128], index: 3, kind: input, shape index: {}]
  %s4 = inlined_call_operand.hbm [shape: f32[128,128], index: 4, kind: input, shape index: {}]
  %s5 = inlined_call_operand.hbm [shape: f32[8,128], index: 5, kind: output, shape index: {}]
  %s6 = sld [smem:[#allocation0]]
  $region46: #{tpu_custom_call.1} parent=0
    _
  %s8 = ssub.s32 1, %s6
  %s9 = scalar_select 0, %s8, %s6
  $region1: #{tpu_custom_call.1} parent=0
    #allocation2 [shape = 'u8[4096]{0}', space=vmem, size = 0x1000, scoped, tag = 'input window, operand 0, single buffered']
    #allocation3 [shape = 's32[1]{0}', space=sflag, size = 0x4, scoped, tag = 'scoped memory for tpu_custom_call.1']
    #allocation4 [shape = 's32[1]{0}', space=sflag, size = 0x4, scoped, tag = 'scoped memory for tpu_custom_call.1']
    #allocation5 [shape = 'u8[8192]{0}', space=vmem, size = 0x2000, scoped, tag = 'input window, operand 2, single buffered']
    #allocation6 [shape = 's32[1]{0}', space=sflag, size = 0x4, scoped, tag = 'scoped memory for tpu_custom_call.1']
    #allocation7 [shape = 'u8[65536]{0}', space=vmem, size = 0x10000, scoped, tag = 'input window, operand 3, single buffered']
    #allocation8 [shape = 'u8[65536]{0}', space=vmem, size = 0x10000, scoped, tag = 'input window, operand 4, single buffered']
    #allocation9 [shape = 's32[1]{0}', space=sflag, size = 0x4, scoped, tag = 'scoped memory for tpu_custom_call.1']
    #allocation10 [shape = 'u8[4096]{0}', space=vmem, size = 0x1000, scoped, tag = 'output window, operand 0, single buffered']
    %10 = vsyncpa [#allocation3], 0
    %11 = vsyncpa [#allocation6], 0
    %12 = vsyncpa [#allocation9], 0
    %13 = vsyncpa [#allocation4], 0
    // Predicated region
    $region2: #{tpu_custom_call.1} parent=1 // pred_check
      _
    $region3: #{tpu_custom_call.1} parent=1 // pred_check_branch
      %15 = sbr.rel (0) target = $region5
    $region4: #{tpu_custom_call.1} parent=1 // pred_region
      %s17 = ssub.s32 128, 128
      %18 = vsyncadd [#allocation3], %s17
      %s20 = sshll.u32 [#allocation2], 4
      %s21 = int_to_ptr.vmem [resolvable:$true] %s20
      %23 = dma.hbm_to_vmem [thread:$0]  %s0, 128, %s21, [#allocation3]
    $region5: #{tpu_custom_call.1} parent=1 // pred_fallthru
      _
    // Predicated region
    $region6: #{tpu_custom_call.1} parent=1 // pred_check
      _
    $region7: #{tpu_custom_call.1} parent=1 // pred_check_branch
      %25 = sbr.rel (0) target = $region9
    $region8: #{tpu_custom_call.1} parent=1 // pred_region
      _
    $region9: #{tpu_custom_call.1} parent=1 // pred_fallthru
      _
    // Predicated region
    $region10: #{tpu_custom_call.1} parent=1 // pred_check
      _
    $region11: #{tpu_custom_call.1} parent=1 // pred_check_branch
      %27 = sbr.rel (0) target = $region13
    $region12: #{tpu_custom_call.1} parent=1 // pred_region
      %s29 = ssub.s32 256, 256
      %30 = vsyncadd [#allocation6], %s29
      %s31 = sshll.u32 [#allocation5], 4
      %s32 = int_to_ptr.vmem [resolvable:$true] %s31
      %37 = dma.hbm_to_vmem [thread:$0]  %s2, 256, %s32, [#allocation6], 128, 128, 8
    $region13: #{tpu_custom_call.1} parent=1 // pred_fallthru
      _
    // Predicated region
    $region14: #{tpu_custom_call.1} parent=1 // pred_check
      _
    $region15: #{tpu_custom_call.1} parent=1 // pred_check_branch
      %39 = sbr.rel (0) target = $region17
    $region16: #{tpu_custom_call.1} parent=1 // pred_region
      %s41 = ssub.s32 2048, 2048
      %42 = vsyncadd [#allocation6], %s41
      %s43 = sshll.u32 [#allocation7], 4
      %s44 = int_to_ptr.vmem [resolvable:$true] %s43
      %49 = dma.hbm_to_vmem [thread:$0]  %s3, 2048, %s44, [#allocation6], 128, 128, 8
    $region17: #{tpu_custom_call.1} parent=1 // pred_fallthru
      _
    // Predicated region
    $region18: #{tpu_custom_call.1} parent=1 // pred_check
      _
    $region19: #{tpu_custom_call.1} parent=1 // pred_check_branch
      %51 = sbr.rel (0) target = $region21
    $region20: #{tpu_custom_call.1} parent=1 // pred_region
      %s53 = ssub.s32 2048, 2048
      %54 = vsyncadd [#allocation9], %s53
      %s55 = sshll.u32 [#allocation8], 4
      %s56 = int_to_ptr.vmem [resolvable:$true] %s55
      %61 = dma.hbm_to_vmem [thread:$0]  %s4, 2048, %s56, [#allocation9], 128, 128, 8
    $region21: #{tpu_custom_call.1} parent=1 // pred_fallthru
      _
    // Predicated region
    $region22: #{tpu_custom_call.1} parent=1 // pred_check
      _
    $region23: #{tpu_custom_call.1} parent=1 // pred_check_branch
      %63 = sbr.rel (0) target = $region25
    $region24: #{tpu_custom_call.1} parent=1 // pred_region
      %64 = dma.done [#allocation3], 128
    $region25: #{tpu_custom_call.1} parent=1 // pred_fallthru
      _
    // Predicated region
    $region26: #{tpu_custom_call.1} parent=1 // pred_check
      _
    $region27: #{tpu_custom_call.1} parent=1 // pred_check_branch
      %66 = sbr.rel (0) target = $region29
    $region28: #{tpu_custom_call.1} parent=1 // pred_region
      %67 = dma.done [#allocation6], 256
    $region29: #{tpu_custom_call.1} parent=1 // pred_fallthru
      _
    // Predicated region
    $region30: #{tpu_custom_call.1} parent=1 // pred_check
      _
    $region31: #{tpu_custom_call.1} parent=1 // pred_check_branch
      %69 = sbr.rel (0) target = $region33
    $region32: #{tpu_custom_call.1} parent=1 // pred_region
      %70 = dma.done [#allocation6], 2048
    $region33: #{tpu_custom_call.1} parent=1 // pred_fallthru
      _
    // Predicated region
    $region34: #{tpu_custom_call.1} parent=1 // pred_check
      _
    $region35: #{tpu_custom_call.1} parent=1 // pred_check_branch
      %72 = sbr.rel (0) target = $region37
    $region36: #{tpu_custom_call.1} parent=1 // pred_region
      %73 = dma.done [#allocation9], 2048
    $region37: #{tpu_custom_call.1} parent=1 // pred_fallthru
      _
    %v74 = vld [vmem:[#allocation2] sm:$0xff]
    %v75 = vld [vmem:[#allocation5] sm:$0xff]
    %v76 = vld [vmem:[#allocation5 + $0x8] sm:$0x7]
    %v77 = vld [vmem:[%s1] sm:$0x1]
    %v79 = vlaneseq
    %v80 = vshrl.u32 %v79, 7
    %v81 = vsub.s32 0, %v80
    %v82 = vrot.slane %v77, %v81
    %vm84 = vcmask 89088
    %v86 = vsel %vm84, %v74, 0
    %vm88 = vcmask 1042432
    %v90 = vsel %vm88, %v76, 0
    %92 = vmatprep.subr.mxu0 0.0
    %93 = vmatpush1.msra.mxu0 0.0
    %94 = vmatprep.subr.mxu0 0.0
    %95 = vmatpush1.msra.mxu0 0.0
    %96 = vmatprep.subr.mxu0 0.0
    %97 = vmatpush1.msra.mxu0 0.0
    %98 = vmatprep.subr.mxu0 0.0
    %99 = vmatpush1.msra.mxu0 0.0
    %100 = vmatprep.subr.mxu0 0.0
    %101 = vmatpush1.msra.mxu0 0.0
    %102 = vmatprep.subr.mxu0 0.0
    %103 = vmatpush1.msra.mxu0 0.0
    %104 = vmatprep.subr.mxu0 0.0
    %105 = vmatpush1.msra.mxu0 0.0
    %106 = vmatprep.subr.mxu0 0.0
    %107 = vmatpush1.msra.mxu0 0.0
    %108 = vmatprep.subr.mxu0 0.0
    %109 = vmatpush1.msra.mxu0 0.0
    %110 = vmatprep.subr.mxu0 0.0
    %111 = vmatpush1.msra.mxu0 0.0
    %112 = vmatprep.subr.mxu0 0.0
    %113 = vmatpush1.msra.mxu0 0.0
    %114 = vmatprep.subr.mxu0 0.0
    %115 = vmatpush1.msra.mxu0 0.0
    %116 = vmatprep.subr.mxu0 0.0
    %117 = vmatpush1.msra.mxu0 0.0
    %118 = vmatprep.subr.mxu0 0.0
    %119 = vmatpush1.msra.mxu0 0.0
    %120 = vmatprep.subr.mxu0 0.0
    %121 = vmatpush1.msra.mxu0 %v90
    %122 = vmatprep.subr.mxu0 0.0
    %123 = vmatpush1.msra.mxu0 %v75
    %124 = vmatprep.subr.mxu0 0.0
    %125 = vmatpush2.msra.mxu0 0.0
    %126 = vmatprep.subr.mxu0 0.0
    %127 = vmatpush2.msra.mxu0 0.0
    %128 = vmatprep.subr.mxu0 0.0
    %129 = vmatpush2.msra.mxu0 0.0
    %130 = vmatprep.subr.mxu0 0.0
    %131 = vmatpush2.msra.mxu0 0.0
    %132 = vmatprep.subr.mxu0 0.0
    %133 = vmatpush2.msra.mxu0 0.0
    %134 = vmatprep.subr.mxu0 0.0
    %135 = vmatpush2.msra.mxu0 0.0
    %136 = vmatprep.subr.mxu0 0.0
    %137 = vmatpush2.msra.mxu0 0.0
    %138 = vmatprep.subr.mxu0 0.0
    %139 = vmatpush2.msra.mxu0 0.0
    %140 = vmatprep.subr.mxu0 0.0
    %141 = vmatpush2.msra.mxu0 0.0
    %142 = vmatprep.subr.mxu0 0.0
    %143 = vmatpush2.msra.mxu0 0.0
    %144 = vmatprep.subr.mxu0 0.0
    %145 = vmatpush2.msra.mxu0 0.0
    %146 = vmatprep.subr.mxu0 0.0
    %147 = vmatpush2.msra.mxu0 0.0
    %148 = vmatprep.subr.mxu0 0.0
    %149 = vmatpush2.msra.mxu0 0.0
    %150 = vmatprep.subr.mxu0 0.0
    %151 = vmatpush2.msra.mxu0 0.0
    %152 = vmatprep.subr.mxu0 0.0
    %153 = vmatpush2.msra.mxu0 0.0
    %154 = vmatprep.subr.mxu0 0.0
    %155 = vmatpush2.msra.mxu0 0.0
    %156 = vmatprep.mubr.f32.mxu0 0.0
    %157 = vmatmul.mubr.f32.gmra.mxu0 %v86
    %v158 = vpop.f32.mrf.mxu0
    %v159 = vadd.f32 %v82, %v158
    %v160 = vpop.f32.mrf.mxu0
    %161 = vdwg.mxu0
    %v162 = vmax.f32 %v159, 0.0
    %v163 = vld [vmem:[#allocation7] sm:$0xff]
    %v164 = vld [vmem:[#allocation7 + $0x8] sm:$0xff]
    %v165 = vld [vmem:[#allocation7 + $0x10] sm:$0xff]
    %v166 = vld [vmem:[#allocation7 + $0x18] sm:$0xff]
    %v167 = vld [vmem:[#allocation7 + $0x20] sm:$0xff]
    %v168 = vld [vmem:[#allocation7 + $0x28] sm:$0xff]
    %v169 = vld [vmem:[#allocation7 + $0x30] sm:$0xff]
    %v170 = vld [vmem:[#allocation7 + $0x38] sm:$0xff]
    %v171 = vld [vmem:[#allocation7 + $0x40] sm:$0xff]
    %v172 = vld [vmem:[#allocation7 + $0x48] sm:$0xff]
    %v173 = vld [vmem:[#allocation7 + $0x50] sm:$0xff]
    %v174 = vld [vmem:[#allocation7 + $0x58] sm:$0xff]
    %v175 = vld [vmem:[#allocation7 + $0x60] sm:$0xff]
    %v176 = vld [vmem:[#allocation7 + $0x68] sm:$0xff]
    %v177 = vld [vmem:[#allocation7 + $0x70] sm:$0xff]
    %v178 = vld [vmem:[#allocation7 + $0x78] sm:$0xff]
    %179 = vmatprep.subr.mxu0 0.0
    %180 = vmatpush1.msra.mxu0 %v178
    %181 = vmatprep.subr.mxu0 0.0
    %182 = vmatpush1.msra.mxu0 %v177
    %183 = vmatprep.subr.mxu0 0.0
    %184 = vmatpush1.msra.mxu0 %v176
    %185 = vmatprep.subr.mxu0 0.0
    %186 = vmatpush1.msra.mxu0 %v175
    %187 = vmatprep.subr.mxu0 0.0
    %188 = vmatpush1.msra.mxu0 %v174
    %189 = vmatprep.subr.mxu0 0.0
    %190 = vmatpush1.msra.mxu0 %v173
    %191 = vmatprep.subr.mxu0 0.0
    %192 = vmatpush1.msra.mxu0 %v172
    %193 = vmatprep.subr.mxu0 0.0
    %194 = vmatpush1.msra.mxu0 %v171
    %195 = vmatprep.subr.mxu0 0.0
    %196 = vmatpush1.msra.mxu0 %v170
    %197 = vmatprep.subr.mxu0 0.0
    %198 = vmatpush1.msra.mxu0 %v169
    %199 = vmatprep.subr.mxu0 0.0
    %200 = vmatpush1.msra.mxu0 %v168
    %201 = vmatprep.subr.mxu0 0.0
    %202 = vmatpush1.msra.mxu0 %v167
    %203 = vmatprep.subr.mxu0 0.0
    %204 = vmatpush1.msra.mxu0 %v166
    %205 = vmatprep.subr.mxu0 0.0
    %206 = vmatpush1.msra.mxu0 %v165
    %207 = vmatprep.subr.mxu0 0.0
    %208 = vmatpush1.msra.mxu0 %v164
    %209 = vmatprep.subr.mxu0 0.0
    %210 = vmatpush1.msra.mxu0 %v163
    %211 = vmatprep.subr.mxu0 0.0
    %212 = vmatpush2.msra.mxu0 0.0
    %213 = vmatprep.subr.mxu0 0.0
    %214 = vmatpush2.msra.mxu0 0.0
    %215 = vmatprep.subr.mxu0 0.0
    %216 = vmatpush2.msra.mxu0 0.0
    %217 = vmatprep.subr.mxu0 0.0
    %218 = vmatpush2.msra.mxu0 0.0
    %219 = vmatprep.subr.mxu0 0.0
    %220 = vmatpush2.msra.mxu0 0.0
    %221 = vmatprep.subr.mxu0 0.0
    %222 = vmatpush2.msra.mxu0 0.0
    %223 = vmatprep.subr.mxu0 0.0
    %224 = vmatpush2.msra.mxu0 0.0
    %225 = vmatprep.subr.mxu0 0.0
    %226 = vmatpush2.msra.mxu0 0.0
    %227 = vmatprep.subr.mxu0 0.0
    %228 = vmatpush2.msra.mxu0 0.0
    %229 = vmatprep.subr.mxu0 0.0
    %230 = vmatpush2.msra.mxu0 0.0
    %231 = vmatprep.subr.mxu0 0.0
    %232 = vmatpush2.msra.mxu0 0.0
    %233 = vmatprep.subr.mxu0 0.0
    %234 = vmatpush2.msra.mxu0 0.0
    %235 = vmatprep.subr.mxu0 0.0
    %236 = vmatpush2.msra.mxu0 0.0
    %237 = vmatprep.subr.mxu0 0.0
    %238 = vmatpush2.msra.mxu0 0.0
    %239 = vmatprep.subr.mxu0 0.0
    %240 = vmatpush2.msra.mxu0 0.0
    %241 = vmatprep.subr.mxu0 0.0
    %242 = vmatpush2.msra.mxu0 0.0
    %243 = vmatprep.mubr.f32.mxu0 0.0
    %244 = vmatmul.mubr.f32.gmra.mxu0 %v162
    %v245 = vpop.f32.mrf.mxu0
    %v246 = vadd.f32 0.0, %v245
    %v247 = vpop.f32.mrf.mxu0
    %248 = vdwg.mxu0
    %v249 = vmax.f32 %v246, 0.0
    %v250 = vld [vmem:[#allocation8] sm:$0xff]
    %v251 = vld [vmem:[#allocation8 + $0x8] sm:$0xff]
    %v252 = vld [vmem:[#allocation8 + $0x10] sm:$0xff]
    %v253 = vld [vmem:[#allocation8 + $0x18] sm:$0xff]
    %v254 = vld [vmem:[#allocation8 + $0x20] sm:$0xff]
    %v255 = vld [vmem:[#allocation8 + $0x28] sm:$0xff]
    %v256 = vld [vmem:[#allocation8 + $0x30] sm:$0xff]
    %v257 = vld [vmem:[#allocation8 + $0x38] sm:$0xff]
    %v258 = vld [vmem:[#allocation8 + $0x40] sm:$0xff]
    %v259 = vld [vmem:[#allocation8 + $0x48] sm:$0xff]
    %v260 = vld [vmem:[#allocation8 + $0x50] sm:$0xff]
    %v261 = vld [vmem:[#allocation8 + $0x58] sm:$0xff]
    %v262 = vld [vmem:[#allocation8 + $0x60] sm:$0xff]
    %v263 = vld [vmem:[#allocation8 + $0x68] sm:$0xff]
    %v264 = vld [vmem:[#allocation8 + $0x70] sm:$0xff]
    %v265 = vld [vmem:[#allocation8 + $0x78] sm:$0xff]
    %266 = vmatprep.subr.mxu0 0.0
    %267 = vmatpush1.msra.mxu0 %v265
    %268 = vmatprep.subr.mxu0 0.0
    %269 = vmatpush1.msra.mxu0 %v264
    %270 = vmatprep.subr.mxu0 0.0
    %271 = vmatpush1.msra.mxu0 %v263
    %272 = vmatprep.subr.mxu0 0.0
    %273 = vmatpush1.msra.mxu0 %v262
    %274 = vmatprep.subr.mxu0 0.0
    %275 = vmatpush1.msra.mxu0 %v261
    %276 = vmatprep.subr.mxu0 0.0
    %277 = vmatpush1.msra.mxu0 %v260
    %278 = vmatprep.subr.mxu0 0.0
    %279 = vmatpush1.msra.mxu0 %v259
    %280 = vmatprep.subr.mxu0 0.0
    %281 = vmatpush1.msra.mxu0 %v258
    %282 = vmatprep.subr.mxu0 0.0
    %283 = vmatpush1.msra.mxu0 %v257
    %284 = vmatprep.subr.mxu0 0.0
    %285 = vmatpush1.msra.mxu0 %v256
    %286 = vmatprep.subr.mxu0 0.0
    %287 = vmatpush1.msra.mxu0 %v255
    %288 = vmatprep.subr.mxu0 0.0
    %289 = vmatpush1.msra.mxu0 %v254
    %290 = vmatprep.subr.mxu0 0.0
    %291 = vmatpush1.msra.mxu0 %v253
    %292 = vmatprep.subr.mxu0 0.0
    %293 = vmatpush1.msra.mxu0 %v252
    %294 = vmatprep.subr.mxu0 0.0
    %295 = vmatpush1.msra.mxu0 %v251
    %296 = vmatprep.subr.mxu0 0.0
    %297 = vmatpush1.msra.mxu0 %v250
    %298 = vmatprep.subr.mxu0 0.0
    %299 = vmatpush2.msra.mxu0 0.0
    %300 = vmatprep.subr.mxu0 0.0
    %301 = vmatpush2.msra.mxu0 0.0
    %302 = vmatprep.subr.mxu0 0.0
    %303 = vmatpush2.msra.mxu0 0.0
    %304 = vmatprep.subr.mxu0 0.0
    %305 = vmatpush2.msra.mxu0 0.0
    %306 = vmatprep.subr.mxu0 0.0
    %307 = vmatpush2.msra.mxu0 0.0
    %308 = vmatprep.subr.mxu0 0.0
    %309 = vmatpush2.msra.mxu0 0.0
    %310 = vmatprep.subr.mxu0 0.0
    %311 = vmatpush2.msra.mxu0 0.0
    %312 = vmatprep.subr.mxu0 0.0
    %313 = vmatpush2.msra.mxu0 0.0
    %314 = vmatprep.subr.mxu0 0.0
    %315 = vmatpush2.msra.mxu0 0.0
    %316 = vmatprep.subr.mxu0 0.0
    %317 = vmatpush2.msra.mxu0 0.0
    %318 = vmatprep.subr.mxu0 0.0
    %319 = vmatpush2.msra.mxu0 0.0
    %320 = vmatprep.subr.mxu0 0.0
    %321 = vmatpush2.msra.mxu0 0.0
    %322 = vmatprep.subr.mxu0 0.0
    %323 = vmatpush2.msra.mxu0 0.0
    %324 = vmatprep.subr.mxu0 0.0
    %325 = vmatpush2.msra.mxu0 0.0
    %326 = vmatprep.subr.mxu0 0.0
    %327 = vmatpush2.msra.mxu0 0.0
    %328 = vmatprep.subr.mxu0 0.0
    %329 = vmatpush2.msra.mxu0 0.0
    %330 = vmatprep.mubr.f32.mxu0 0.0
    %331 = vmatmul.mubr.f32.gmra.mxu0 %v249
    %v332 = vpop.f32.mrf.mxu0
    %v333 = vadd.f32 0.0, %v332
    %v334 = vpop.f32.mrf.mxu0
    %335 = vdwg.mxu0
    %336 = vst [vmem:[#allocation10] sm:$0xff] %v333
    // Predicated region
    $region38: #{tpu_custom_call.1} parent=1 // pred_check
      _
    $region39: #{tpu_custom_call.1} parent=1 // pred_check_branch
      %338 = sbr.rel (0) target = $region41
    $region40: #{tpu_custom_call.1} parent=1 // pred_region
      %s340 = ssub.s32 128, 128
      %341 = vsyncadd [#allocation4], %s340
      %s343 = sshll.u32 [#allocation10], 4
      %s344 = int_to_ptr.vmem [resolvable:$true] %s343
      %346 = dma.vmem_to_hbm [thread:$0]  %s344, 128, %s5, [#allocation4]
    $region41: #{tpu_custom_call.1} parent=1 // pred_fallthru
      _
    // Predicated region
    $region42: #{tpu_custom_call.1} parent=1 // pred_check
      _
    $region43: #{tpu_custom_call.1} parent=1 // pred_check_branch
      %348 = sbr.rel (0) target = $region45
    $region44: #{tpu_custom_call.1} parent=1 // pred_region
      %349 = dma.done [#allocation4], 128
    $region45: #{tpu_custom_call.1} parent=1 // pred_fallthru
      _
    %350 = vsyncpa [#allocation3], 1
    %351 = vsyncpa [#allocation6], 1
    %352 = vsyncpa [#allocation9], 1
    %353 = vsyncpa [#allocation4], 1

</llo_original>
